<compile_context>
chip_gen: v7x
topology: tpu7x:2x2x1
jax: 0.10.0
libtpu: 0.0.40
codegen_flags: <defaults>
</compile_context>

<pallas_src>
import functools
import math

import jax
import jax.numpy as jnp
from jax.experimental import pallas as pl
from jax.experimental.pallas import tpu as pltpu


# ------------------------------- helpers ------------------------------------

_SUBLANE = {4: 8, 2: 16, 1: 32}           # itemsize -> native sublane multiple
_TILE_VMEM_BUDGET = 32 * 1024 * 1024      # target footprint for double-buffered tiles
_VMEM_LIMIT = 48 * 1024 * 1024            # scoped VMEM limit (safe on v7x 64 MiB)


def _round_up(x: int, m: int) -> int:
    return ((x + m - 1) // m) * m


def build_block_circulant(kernel):
    """kernel: (P, Q, b) -> Wd: (P*b, Q*b) with Wd[p*b+i, q*b+j] = kernel[p,q,(i-j)%b]."""
    P, Q, b = kernel.shape
    i = jnp.arange(b)[:, None]
    j = jnp.arange(b)[None, :]
    idx = (i - j) % b                                   # (b, b)
    circ = kernel[:, :, idx]                            # (P, Q, b, b)
    return circ.transpose(0, 2, 1, 3).reshape(P * b, Q * b)


def _tile_footprint(tm, tk, tn, n_w, in_isize, out_isize, multi_k):
    b = 2 * tm * tk * in_isize            # x tile, double-buffered
    b += 2 * n_w * tk * tn * in_isize     # weight tile(s), double-buffered
    b += 2 * tm * tn * out_isize          # output tile, double-buffered
    b += 2 * tn * 4                       # bias tile
    if multi_k:
        b += tm * tn * 4                  # f32 accumulator scratch
    return b


# ----------------------------- Pallas kernels --------------------------------

def _c3a_kernel_single_k(*refs, n_w):
    """Weight-resident fast path: whole K reduction in one grid step.

    refs = (x_ref, w_ref[0..n_w-1], bias_ref, o_ref)
    """
    x_ref = refs[0]
    w_refs = refs[1:1 + n_w]
    bias_ref = refs[1 + n_w]
    o_ref = refs[2 + n_w]

    x = x_ref[...]
    acc = jnp.dot(x, w_refs[0][...], preferred_element_type=jnp.float32)
    for w_ref in w_refs[1:]:              # static loop: 1 (folded) or 2 matmuls
        acc = acc + jnp.dot(x, w_ref[...], preferred_element_type=jnp.float32)
    o_ref[...] = (acc + bias_ref[...]).astype(o_ref.dtype)


def _c3a_kernel_tiled_k(*refs, n_w):
    """Tiled-K fallback with f32 VMEM accumulator.

    refs = (x_ref, w_ref[0..n_w-1], bias_ref, o_ref, acc_ref)
    """
    x_ref = refs[0]
    w_refs = refs[1:1 + n_w]
    bias_ref = refs[1 + n_w]
    o_ref = refs[2 + n_w]
    acc_ref = refs[3 + n_w]

    @pl.when(pl.program_id(2) == 0)
    def _():
        acc_ref[...] = jnp.zeros_like(acc_ref)

    x = x_ref[...]
    acc = acc_ref[...]
    for w_ref in w_refs:
        acc = acc + jnp.dot(x, w_ref[...], preferred_element_type=jnp.float32)
    acc_ref[...] = acc

    @pl.when(pl.program_id(2) == pl.num_programs(2) - 1)
    def _():
        o_ref[...] = (acc_ref[...] + bias_ref[...]).astype(o_ref.dtype)


# ----------------------- one-time parameter preparation ----------------------

def prepare_c3a_weights(base_w, base_b, c3a_kernel, *, compute_dtype,
                        fold=True, max_tn=512, max_tk=1024,
                        resident_weight_budget=12 * 1024 * 1024):
    """Build (K, N)-layout weights once at parameter-load time.

    base_w:     (out_features, in_features)
    base_b:     (out_features,)
    c3a_kernel: (out_features // b, in_features // b, b)
    fold=True : single W_eff = W_base^T + Wd^T / in_features  (production path)
    fold=False: two separate weights (base + pre-scaled adapter) — numerics debug only.
    """
    out_features, in_features = base_w.shape
    inv_in = 1.0 / float(in_features)

    # Adapter delta weight, built in f32 (matches reference), pre-scaled by 1/in.
    wd_t = (build_block_circulant(c3a_kernel.astype(jnp.float32)) * inv_in).T   # (K, N) f32
    wb_t = base_w.T                                                             # (K, N)

    if fold:
        weights = [(wb_t.astype(jnp.float32) + wd_t).astype(compute_dtype)]
    else:
        weights = [wb_t.astype(compute_dtype), wd_t.astype(compute_dtype)]
    n_w = len(weights)

    K, N = in_features, out_features
    isize = jnp.dtype(compute_dtype).itemsize

    # ---- N (lane) tiling: full-extent for small N, otherwise a multiple of 128.
    # Prefer a width that divides round_up(N,128) (no pad) AND yields >= 2
    # j-blocks, so both v7x TensorCores get work even when M is tiny.
    if N <= 128:
        tn = N
    else:
        Nr = _round_up(N, 128)
        tn = 128
        for cand in range(min(max_tn, Nr) // 128, 0, -1):
            c = cand * 128
            if Nr % c == 0 and Nr // c >= 2:
                tn = c
                break
    Np = _round_up(N, tn)

    # ---- K (reduction) tiling: weight-resident single-k path when the
    # double-buffered (K, tn) column panel(s) fit the budget; otherwise tile K.
    if 2 * n_w * K * tn * isize <= resident_weight_budget:
        tk, Kp = K, K                                  # no K pad, no k grid axis
    elif K % 128 == 0:
        t = max(1, min(max_tk, K) // 128)
        while K % (t * 128) != 0:                      # largest 128-multiple dividing K
            t -= 1
        tk, Kp = t * 128, K                            # no activation-side K pad
    else:
        tk = min(max_tk, _round_up(K, 128))
        Kp = _round_up(K, tk)                          # rare: pad weight + x along K

    if (Kp, Np) != (K, N):
        weights = [jnp.pad(w, ((0, Kp - K), (0, Np - N))) for w in weights]
    bias = jnp.pad(base_b.astype(jnp.float32), (0, Np - N)).reshape(1, Np)

    return dict(weights=tuple(weights), bias=bias,
                in_features=K, out_features=N,
                Kp=Kp, Np=Np, tk=tk, tn=tn)


# --------------------------------- forward ----------------------------------

def c3a_linear(x, prepared, *, max_tm=512):
    """x: (..., in_features) -> (..., out_features). `prepared` from prepare_c3a_weights."""
    orig_shape = x.shape
    out_dtype = x.dtype
    K = orig_shape[-1]
    assert K == prepared["in_features"]
    N = prepared["out_features"]
    Kp, Np = prepared["Kp"], prepared["Np"]
    tk, tn = prepared["tk"], prepared["tn"]
    weights = prepared["weights"]
    bias = prepared["bias"]
    n_w = len(weights)
    compute_dtype = weights[0].dtype

    in_isize = jnp.dtype(compute_dtype).itemsize
    out_isize = jnp.dtype(out_dtype).itemsize
    sub = _SUBLANE.get(in_isize, 8)

    M = math.prod(orig_shape[:-1]) if len(orig_shape) > 1 else 1
    x2 = x.reshape(M, K)
    if x2.dtype != compute_dtype:
        x2 = x2.astype(compute_dtype)      # guarantee the fast (bf16-capable) MXU path

    multi_k = (Kp // tk) > 1
    tm = min(max_tm, _round_up(max(M, 1), sub))
    while tm > sub and _tile_footprint(tm, tk, tn, n_w, in_isize, out_isize,
                                       multi_k) > _TILE_VMEM_BUDGET:
        tm = max(sub, _round_up(tm // 2, sub))
    Mp = _round_up(M, tm)

    if (Mp, Kp) != (M, K):                 # skipped entirely when shapes line up
        x2 = jnp.pad(x2, ((0, Mp - M), (0, Kp - K)))

    cost = pl.CostEstimate(
        flops=2 * Mp * Np * Kp * n_w,
        transcendentals=0,
        bytes_accessed=(Mp * Kp * in_isize + n_w * Kp * Np * in_isize
                        + Np * 4 + Mp * Np * out_isize))

    if not multi_k:
        # Weight-resident single-k path: no accumulator, no pl.when gates.
        grid = (Mp // tm, Np // tn)
        in_specs = [pl.BlockSpec((tm, Kp), lambda i, j: (i, 0))]
        in_specs += [pl.BlockSpec((Kp, tn), lambda i, j: (0, j)) for _ in range(n_w)]
        in_specs += [pl.BlockSpec((1, tn), lambda i, j: (0, j))]
        out = pl.pallas_call(
            functools.partial(_c3a_kernel_single_k, n_w=n_w),
            out_shape=jax.ShapeDtypeStruct((Mp, Np), out_dtype),
            grid_spec=pltpu.PrefetchScalarGridSpec(
                num_scalar_prefetch=0,
                grid=grid,
                in_specs=in_specs,
                out_specs=pl.BlockSpec((tm, tn), lambda i, j: (i, j)),
            ),
            compiler_params=pltpu.CompilerParams(
                dimension_semantics=("parallel", "parallel"),
                vmem_limit_bytes=_VMEM_LIMIT),
            cost_estimate=cost,
        )(x2, *weights, bias)
    else:
        # Tiled-K fallback for very large K.
        grid = (Mp // tm, Np // tn, Kp // tk)
        in_specs = [pl.BlockSpec((tm, tk), lambda i, j, k: (i, k))]
        in_specs += [pl.BlockSpec((tk, tn), lambda i, j, k: (k, j)) for _ in range(n_w)]
        in_specs += [pl.BlockSpec((1, tn), lambda i, j, k: (0, j))]
        out = pl.pallas_call(
            functools.partial(_c3a_kernel_tiled_k, n_w=n_w),
            out_shape=jax.ShapeDtypeStruct((Mp, Np), out_dtype),
            grid_spec=pltpu.PrefetchScalarGridSpec(
                num_scalar_prefetch=0,
                grid=grid,
                in_specs=in_specs,
                out_specs=pl.BlockSpec((tm, tn), lambda i, j, k: (i, j)),
                scratch_shapes=[pltpu.VMEM((tm, tn), jnp.float32)],
            ),
            compiler_params=pltpu.CompilerParams(
                dimension_semantics=("parallel", "parallel", "arbitrary"),
                vmem_limit_bytes=_VMEM_LIMIT),
            cost_estimate=cost,
        )(x2, *weights, bias)

    if (Mp, Np) != (M, N):
        out = out[:M, :N]
    return out.reshape(*orig_shape[:-1], N)


# ----------------------- pure-JAX reference (FFT path) ----------------------

def c3a_linear_ref(x, base_w, base_b, c3a_kernel):
    """Mirrors the torch forward, including the FFT-based BlockCircularConvolution."""
    prev_dtype = x.dtype
    result = x @ base_w.T.astype(x.dtype) + base_b.astype(x.dtype)
    xf = x.astype(jnp.float32)
    P, Q, b = c3a_kernel.shape
    xb = xf.reshape(*xf.shape[:-1], Q, b)
    x_fft = jnp.fft.rfft(xb)
    k_fft = jnp.fft.rfft(c3a_kernel.astype(jnp.float32))
    conv = jnp.fft.irfft(jnp.einsum("...qb,pqb->...pb", x_fft, k_fft), n=b)
    delta = conv.reshape(*xf.shape[:-1], P * b) / xf.shape[-1]
    result = result + delta.astype(result.dtype)
    return result.astype(prev_dtype)


# ------------------------------------ main ----------------------------------

if __name__ == "__main__":
    key = jax.random.PRNGKey(0)
    k_x, k_w, k_b, k_k, k_x2, k_w2, k_b2, k_k2 = jax.random.split(key, 8)

    # --- small config (matches module defaults) -----------------------------
    batch, seq = 2, 8
    in_features, out_features, block_size = 32, 32, 8

    x = jax.random.normal(k_x, (batch, seq, in_features), dtype=jnp.float32)
    bound = 1.0 / math.sqrt(in_features)
    base_w = jax.random.uniform(k_w, (out_features, in_features), jnp.float32,
                                minval=-bound, maxval=bound)
    base_b = jax.random.uniform(k_b, (out_features,), jnp.float32,
                                minval=-bound, maxval=bound)
    a = math.sqrt(1.0 / in_features)
    c3a_kernel = jax.random.uniform(
        k_k, (out_features // block_size, in_features // block_size, block_size),
        jnp.float32, minval=-a, maxval=a)

    ref = jax.block_until_ready(c3a_linear_ref(x, base_w, base_b, c3a_kernel))

    for fold in (True, False):   # fold=True is the production path; False = numerics debug
        prepared = prepare_c3a_weights(base_w, base_b, c3a_kernel,
                                       compute_dtype=x.dtype, fold=fold)
        out = jax.block_until_ready(c3a_linear(x, prepared))
        assert out.shape == (batch, seq, out_features)
        assert out.dtype == x.dtype
        err = float(jnp.max(jnp.abs(out - ref)))
        assert err < 1e-4, f"fold={fold}: max abs err {err}"

    # --- medium config: exercises both the weight-resident single-k path and
    # the tiled-K accumulator path -------------------------------------------
    in2, out2, bs2 = 256, 256, 16
    x_m = jax.random.normal(k_x2, (2, 8, in2), dtype=jnp.float32)
    bound2 = 1.0 / math.sqrt(in2)
    base_w2 = jax.random.uniform(k_w2, (out2, in2), jnp.float32,
                                 minval=-bound2, maxval=bound2)
    base_b2 = jax.random.uniform(k_b2, (out2,), jnp.float32,
                                 minval=-bound2, maxval=bound2)
    a2 = math.sqrt(1.0 / in2)
    c3a_kernel2 = jax.random.uniform(k_k2, (out2 // bs2, in2 // bs2, bs2),
                                     jnp.float32, minval=-a2, maxval=a2)

    ref2 = jax.block_until_ready(c3a_linear_ref(x_m, base_w2, base_b2, c3a_kernel2))

    prep_resident = prepare_c3a_weights(base_w2, base_b2, c3a_kernel2,
                                        compute_dtype=x_m.dtype)               # single-k
    prep_tiled_k = prepare_c3a_weights(base_w2, base_b2, c3a_kernel2,
                                       compute_dtype=x_m.dtype,
                                       max_tk=128, resident_weight_budget=0)   # tiled-K
    for prep in (prep_resident, prep_tiled_k):
        out_m = jax.block_until_ready(c3a_linear(x_m, prep))
        assert out_m.shape == (2, 8, out2)
        err = float(jnp.max(jnp.abs(out_m - ref2)))
        assert err < 5e-4, f"medium config: max abs err {err}"

    print("KERNEL_OK")
</pallas_src>

<mosaic_0001>
module attributes {stable_mosaic.version = 11 : i64} {
  func.func @_c3a_kernel_single_k(%arg0: i32, %arg1: i32, %arg2: memref<16x32xf32, #tpu.memory_space<vmem>>, %arg3: memref<32x32xf32, #tpu.memory_space<vmem>>, %arg4: memref<1x32xf32, #tpu.memory_space<vmem>>, %arg5: memref<16x32xf32, #tpu.memory_space<vmem>>) attributes {dimension_semantics = [#tpu.dimension_semantics<parallel>, #tpu.dimension_semantics<parallel>], iteration_bounds = array<i64: 1, 1>, scalar_prefetch = 0 : i64, scratch_operands = 0 : i64, tpu.core_type = #tpu.core_type<tc>, window_params = [{transform_indices = @transform_0, window_bounds = array<i64: 16, 32>}, {transform_indices = @transform_1, window_bounds = array<i64: 32, 32>}, {transform_indices = @transform_2, window_bounds = array<i64: 1, 32>}, {transform_indices = @transform_3, window_bounds = array<i64: 16, 32>}]} {
    %c0 = arith.constant 0 : index
    %c0_0 = arith.constant 0 : index
    %0 = vector.load %arg2[%c0, %c0_0] : memref<16x32xf32, #tpu.memory_space<vmem>>, vector<16x32xf32>
    %c0_1 = arith.constant 0 : index
    %c0_2 = arith.constant 0 : index
    %1 = vector.load %arg3[%c0_1, %c0_2] : memref<32x32xf32, #tpu.memory_space<vmem>>, vector<32x32xf32>
    %cst = arith.constant dense<0.000000e+00> : vector<16x32xf32>
    %2 = tpu.matmul %0, %1, %cst {dimension_numbers = #tpu.dot_dimension_numbers<[1], [0], [0], [1], [0, 0, 1, 1], [], []>} : vector<16x32xf32>, vector<32x32xf32>, vector<16x32xf32> -> vector<16x32xf32>
    %c0_3 = arith.constant 0 : index
    %c0_4 = arith.constant 0 : index
    %3 = vector.load %arg4[%c0_3, %c0_4] : memref<1x32xf32, #tpu.memory_space<vmem>>, vector<1x32xf32>
    %4 = vector.broadcast %3 : vector<1x32xf32> to vector<16x32xf32>
    %5 = arith.addf %2, %4 : vector<16x32xf32>
    %c0_5 = arith.constant 0 : index
    %c0_6 = arith.constant 0 : index
    %6 = vector.load %arg5[%c0_5, %c0_6] : memref<16x32xf32, #tpu.memory_space<vmem>>, vector<16x32xf32>
    tpu.vector_store %arg5[%c0_5, %c0_6], %5 {strides = array<i32>} : memref<16x32xf32, #tpu.memory_space<vmem>>, vector<16x32xf32>,
    return
  }
  func.func @transform_0(%arg0: i32, %arg1: i32) -> (i32, i32) {
    %c0_i32 = arith.constant 0 : i32
    %c0_i32_0 = arith.constant 0 : i32
    return %arg0, %c0_i32 : i32, i32
  }
  func.func @transform_1(%arg0: i32, %arg1: i32) -> (i32, i32) {
    %c0_i32 = arith.constant 0 : i32
    %c0_i32_0 = arith.constant 0 : i32
    return %c0_i32, %arg1 : i32, i32
  }
  func.func @transform_2(%arg0: i32, %arg1: i32) -> (i32, i32) {
    %c0_i32 = arith.constant 0 : i32
    %c0_i32_0 = arith.constant 0 : i32
    return %c0_i32, %arg1 : i32, i32
  }
  func.func @transform_3(%arg0: i32, %arg1: i32) -> (i32, i32) {
    %c0_i32 = arith.constant 0 : i32
    return %arg0, %arg1 : i32, i32
  }
}

</mosaic_0001>

<llo_original>
// kernel: tpu_custom_call.1
$region0: #{tpu_custom_call.1}
  #allocation0 [shape = 'u32[]', space=smem, size = 0x4, offset = 0x4, fixed_abs, tag = 'smem constant byte address 0x4 - core index']
  #allocation1 [shape = 'u32[144,128]{1,0:T(1,128)}', space=vmem, size = 0x12000, scoped, tag = 'internal scratch']
  %s0 = inlined_call_operand.hbm [shape: f32[16,32], index: 0, kind: input, shape index: {}]
  %s1 = inlined_call_operand.hbm [shape: f32[32,32], index: 1, kind: input, shape index: {}]
  %s2 = inlined_call_operand.vmem [shape: f32[1,32], index: 2, kind: input, shape index: {}]
  %s3 = inlined_call_operand.hbm [shape: f32[16,32], index: 3, kind: output, shape index: {}]
  %s4 = sld [smem:[#allocation0]]
  $region30: #{tpu_custom_call.1} parent=0
    _
  %s6 = ssub.s32 1, %s4
  %s7 = scalar_select 0, %s6, %s4
  $region1: #{tpu_custom_call.1} parent=0
    #allocation2 [shape = 'u8[8192]{0}', space=vmem, size = 0x2000, scoped, tag = 'input window, operand 0, single buffered']
    #allocation3 [shape = 's32[1]{0}', space=sflag, size = 0x4, scoped, tag = 'scoped memory for tpu_custom_call.1']
    #allocation4 [shape = 's32[1]{0}', space=sflag, size = 0x4, scoped, tag = 'scoped memory for tpu_custom_call.1']
    #allocation5 [shape = 'u8[16384]{0}', space=vmem, size = 0x4000, scoped, tag = 'input window, operand 1, single buffered']
    #allocation6 [shape = 's32[1]{0}', space=sflag, size = 0x4, scoped, tag = 'scoped memory for tpu_custom_call.1']
    #allocation7 [shape = 'u8[8192]{0}', space=vmem, size = 0x2000, scoped, tag = 'output window, operand 0, single buffered']
    %8 = vsyncpa [#allocation3], 0
    %9 = vsyncpa [#allocation6], 0
    %10 = vsyncpa [#allocation4], 0
    // Predicated region
    $region2: #{tpu_custom_call.1} parent=1 // pred_check
      _
    $region3: #{tpu_custom_call.1} parent=1 // pred_check_branch
      %12 = sbr.rel (0) target = $region5
    $region4: #{tpu_custom_call.1} parent=1 // pred_region
      %s14 = ssub.s32 256, 256
      %15 = vsyncadd [#allocation3], %s14
      %s16 = sshll.u32 [#allocation2], 4
      %s17 = int_to_ptr.vmem [resolvable:$true] %s16
      %22 = dma.hbm_to_vmem [thread:$0]  %s0, 256, %s17, [#allocation3], 128, 128, 8
    $region5: #{tpu_custom_call.1} parent=1 // pred_fallthru
      _
    // Predicated region
    $region6: #{tpu_custom_call.1} parent=1 // pred_check
      _
    $region7: #{tpu_custom_call.1} parent=1 // pred_check_branch
      %24 = sbr.rel (0) target = $region9
    $region8: #{tpu_custom_call.1} parent=1 // pred_region
      %s26 = ssub.s32 512, 512
      %27 = vsyncadd [#allocation6], %s26
      %s28 = sshll.u32 [#allocation5], 4
      %s29 = int_to_ptr.vmem [resolvable:$true] %s28
      %34 = dma.hbm_to_vmem [thread:$0]  %s1, 512, %s29, [#allocation6], 128, 128, 8
    $region9: #{tpu_custom_call.1} parent=1 // pred_fallthru
      _
    // Predicated region
    $region10: #{tpu_custom_call.1} parent=1 // pred_check
      _
    $region11: #{tpu_custom_call.1} parent=1 // pred_check_branch
      %36 = sbr.rel (0) target = $region13
    $region12: #{tpu_custom_call.1} parent=1 // pred_region
      _
    $region13: #{tpu_custom_call.1} parent=1 // pred_fallthru
      _
    // Predicated region
    $region14: #{tpu_custom_call.1} parent=1 // pred_check
      _
    $region15: #{tpu_custom_call.1} parent=1 // pred_check_branch
      %38 = sbr.rel (0) target = $region17
    $region16: #{tpu_custom_call.1} parent=1 // pred_region
      %39 = dma.done [#allocation3], 256
    $region17: #{tpu_custom_call.1} parent=1 // pred_fallthru
      _
    // Predicated region
    $region18: #{tpu_custom_call.1} parent=1 // pred_check
      _
    $region19: #{tpu_custom_call.1} parent=1 // pred_check_branch
      %41 = sbr.rel (0) target = $region21
    $region20: #{tpu_custom_call.1} parent=1 // pred_region
      %42 = dma.done [#allocation6], 512
    $region21: #{tpu_custom_call.1} parent=1 // pred_fallthru
      _
    %v43 = vld [vmem:[#allocation2] sm:$0xff]
    %v44 = vld [vmem:[#allocation2 + $0x8] sm:$0xff]
    %v45 = vld [vmem:[#allocation5] sm:$0xff]
    %v46 = vld [vmem:[#allocation5 + $0x8] sm:$0xff]
    %v47 = vld [vmem:[#allocation5 + $0x10] sm:$0xff]
    %v48 = vld [vmem:[#allocation5 + $0x18] sm:$0xff]
    %v49 = vld [vmem:[%s2] sm:$0x1]
    %v51 = vlaneseq
    %v52 = vshrl.u32 %v51, 7
    %v53 = vsub.s32 0, %v52
    %v54 = vrot.slane %v49, %v53
    %vm56 = vcmask 261120
    %v58 = vsel %vm56, %v43, 0
    %v61 = vsel %vm56, %v44, 0
    %63 = vmatprep.subr.mxu0 0.0
    %64 = vmatpush1.msra.mxu0 %v45
    %65 = vmatprep.subr.mxu0 0.0
    %66 = vmatpush1.msra.mxu0 %v46
    %67 = vmatprep.subr.mxu0 0.0
    %68 = vmatpush1.msra.mxu0 %v47
    %69 = vmatprep.subr.mxu0 0.0
    %70 = vmatpush1.msra.mxu0 %v48
    %71 = vmatprep.subr.mxu0 0.0
    %72 = vmatpush1.msra.mxu0 0.0
    %73 = vmatprep.subr.mxu0 0.0
    %74 = vmatpush1.msra.mxu0 0.0
    %75 = vmatprep.subr.mxu0 0.0
    %76 = vmatpush1.msra.mxu0 0.0
    %77 = vmatprep.subr.mxu0 0.0
    %78 = vmatpush1.msra.mxu0 0.0
    %79 = vmatprep.subr.mxu0 0.0
    %80 = vmatpush1.msra.mxu0 0.0
    %81 = vmatprep.subr.mxu0 0.0
    %82 = vmatpush1.msra.mxu0 0.0
    %83 = vmatprep.subr.mxu0 0.0
    %84 = vmatpush1.msra.mxu0 0.0
    %85 = vmatprep.subr.mxu0 0.0
    %86 = vmatpush1.msra.mxu0 0.0
    %87 = vmatprep.subr.mxu0 0.0
    %88 = vmatpush1.msra.mxu0 0.0
    %89 = vmatprep.subr.mxu0 0.0
    %90 = vmatpush1.msra.mxu0 0.0
    %91 = vmatprep.subr.mxu0 0.0
    %92 = vmatpush1.msra.mxu0 0.0
    %93 = vmatprep.subr.mxu0 0.0
    %94 = vmatpush1.msra.mxu0 0.0
    %95 = vmatprep.subr.mxu0 0.0
    %96 = vmatpush1.msra.mxu0 0.0
    %97 = vmatprep.subr.mxu0 0.0
    %98 = vmatpush1.msra.mxu0 0.0
    %99 = vmatprep.subr.mxu0 0.0
    %100 = vmatpush1.msra.mxu0 0.0
    %101 = vmatprep.subr.mxu0 0.0
    %102 = vmatpush1.msra.mxu0 0.0
    %103 = vmatprep.subr.mxu0 0.0
    %104 = vmatpush1.msra.mxu0 0.0
    %105 = vmatprep.subr.mxu0 0.0
    %106 = vmatpush1.msra.mxu0 0.0
    %107 = vmatprep.subr.mxu0 0.0
    %108 = vmatpush1.msra.mxu0 0.0
    %109 = vmatprep.subr.mxu0 0.0
    %110 = vmatpush1.msra.mxu0 0.0
    %111 = vmatprep.subr.mxu0 0.0
    %112 = vmatpush1.msra.mxu0 0.0
    %113 = vmatprep.subr.mxu0 0.0
    %114 = vmatpush1.msra.mxu0 0.0
    %115 = vmatprep.subr.mxu0 0.0
    %116 = vmatpush1.msra.mxu0 0.0
    %117 = vmatprep.subr.mxu0 0.0
    %118 = vmatpush1.msra.mxu0 0.0
    %119 = vmatprep.subr.mxu0 0.0
    %120 = vmatpush1.msra.mxu0 0.0
    %121 = vmatprep.subr.mxu0 0.0
    %122 = vmatpush1.msra.mxu0 0.0
    %123 = vmatprep.subr.mxu0 0.0
    %124 = vmatpush1.msra.mxu0 0.0
    %125 = vmatprep.subr.mxu0 0.0
    %126 = vmatpush1.msra.mxu0 0.0
    %127 = vmatprep.mubr.f32.mxu0 0.0
    %128 = vmatmul.mubr.f32.gmra.mrb[0].mxu0 %v58
    %v129 = vpop.f32.mrb[0].mxu0
    %v130 = vadd.f32 %v54, %v129
    %v131 = vpop.f32.mrb[0].mxu0
    %132 = vmatprep.mubr.f32.mxu0 0.0
    %133 = vmatmul.mubr.f32.gmra.mrb[0].mxu0 %v61
    %v134 = vpop.f32.mrb[0].mxu0
    %v135 = vadd.f32 %v54, %v134
    %v136 = vpop.f32.mrb[0].mxu0
    %137 = vdwg.mxu0
    %138 = vst.msk [vmem:[#allocation7] sm:$0xff] %vm56, %v130
    %139 = vst.msk [vmem:[#allocation7 + $0x8] sm:$0xff] %vm56, %v135
    // Predicated region
    $region22: #{tpu_custom_call.1} parent=1 // pred_check
      _
    $region23: #{tpu_custom_call.1} parent=1 // pred_check_branch
      %141 = sbr.rel (0) target = $region25
    $region24: #{tpu_custom_call.1} parent=1 // pred_region
      %s143 = ssub.s32 256, 256
      %144 = vsyncadd [#allocation4], %s143
      %s145 = sshll.u32 [#allocation7], 4
      %s146 = int_to_ptr.vmem [resolvable:$true] %s145
      %151 = dma.vmem_to_hbm [thread:$0]  %s146, 256, %s3, [#allocation4], 128, 128, 8
    $region25: #{tpu_custom_call.1} parent=1 // pred_fallthru
      _
    // Predicated region
    $region26: #{tpu_custom_call.1} parent=1 // pred_check
      _
    $region27: #{tpu_custom_call.1} parent=1 // pred_check_branch
      %153 = sbr.rel (0) target = $region29
    $region28: #{tpu_custom_call.1} parent=1 // pred_region
      %154 = dma.done [#allocation4], 256
    $region29: #{tpu_custom_call.1} parent=1 // pred_fallthru
      _
    %155 = vsyncpa [#allocation3], 1
    %156 = vsyncpa [#allocation6], 1
    %157 = vsyncpa [#allocation4], 1

</llo_original>
